<compile_context>
chip_gen: v7x
topology: tpu7x:2x2x1
jax: 0.10.0
libtpu: 0.0.40
codegen_flags: <defaults>
</compile_context>

<pallas_src>
import functools

import jax
import jax.numpy as jnp
from jax.experimental import pallas as pl
from jax.experimental.pallas import tpu as pltpu

# Model sizes implied by the module (concrete choices for the free hparams).
INPUT_SHAPE = (2, 4, 16)       # flattened -> input_n
INPUT_N = 2 * 4 * 16           # 128 (== HIDDEN_N, so all weights pack to 128x128)
HIDDEN_N = 128
OUTPUT_N = 64
OUT_PAD = 128                  # lane-dense padded output width

_LEAKY_SLOPE = 0.01            # PyTorch nn.LeakyReLU default
_MXU_DTYPE = jnp.bfloat16      # matmul input dtype (f32 accumulation)
_OUT_DTYPE = jnp.bfloat16      # kernel output slab dtype (halves writeback bytes)
TB_MAX = 1024                  # max rows per grid step (review: 512-2048)
_ROW_GRAIN = 16                # bf16 sublane tile -> row blocks multiples of 16


def _leaky_relu(v):
    return jnp.where(v > 0, v, _LEAKY_SLOPE * v)


def _elementwise_dtype():
    """bf16 elementwise on bf16-VPU chips (v6e/v7x); f32 on v5e and older."""
    try:
        kind = jax.devices()[0].device_kind.lower()
    except Exception:
        return jnp.float32
    return jnp.bfloat16 if ("v6" in kind or "v7" in kind) else jnp.float32


def mlp_kernel(x_ref, w_ref, b_ref, o_ref, *, elem_dtype):
    """Whole forward pass on one VMEM-resident (rows, 128) activation tile.

    x_ref : (TB, INPUT_N)      f32 or bf16 (cast to bf16 at the dot)
    w_ref : (6, 128, 128)      bf16  [input, h1, h2, h3, h4, output(zero-padded cols)]
    b_ref : (8, 128)           f32   rows 0..5 used (row 5 = zero-padded output bias)
    o_ref : (TB, OUT_PAD)      bf16  columns 64..127 are zero
    """
    def linear(a, i):
        w = w_ref[i]                                          # (128, 128) bf16
        acc = jnp.dot(a.astype(w.dtype), w,
                      preferred_element_type=jnp.float32)     # f32 accumulation
        return acc.astype(elem_dtype) + b_ref[i:i + 1, :].astype(elem_dtype)

    x = x_ref[...]
    h = _leaky_relu(linear(x, 0))                             # input layer
    skip = h
    h = _leaky_relu(linear(h, 1))                             # hidden 1
    h = _leaky_relu(linear(h, 2) + skip)                      # hidden 2 + skip
    skip = h
    h = _leaky_relu(linear(h, 3))                             # hidden 3
    h = _leaky_relu(linear(h, 4) + skip)                      # hidden 4 + skip
    o_ref[...] = linear(h, 5).astype(o_ref.dtype)             # output layer (no activation)


def prepare_params(params):
    """One-time preprocessing (hoisted out of the per-call hot path).

    Takes PyTorch-layout params [(w(out,in), b(out,)), ...] and returns
      w_packed : (6, 128, 128) bf16  weights transposed to (in,out); output
                                     layer zero-padded to 128 columns
      b_packed : (8, 128)      f32   row i = bias of layer i (zero-padded);
                                     rows 6,7 unused
    """
    assert INPUT_N == HIDDEN_N, "weight packing assumes input_n == hidden_n"
    ws, bs = [], []
    for (w, b) in params:
        wt = jnp.transpose(w).astype(jnp.float32)                        # (in, out)
        wt = jnp.pad(wt, ((0, 0), (0, OUT_PAD - wt.shape[1])))
        ws.append(wt.astype(_MXU_DTYPE))
        bs.append(jnp.pad(b.astype(jnp.float32), (0, OUT_PAD - b.shape[0])))
    w_packed = jnp.stack(ws, axis=0)                                     # (6,128,128)
    b_packed = jnp.zeros((8, OUT_PAD), jnp.float32).at[:6, :].set(jnp.stack(bs, axis=0))
    return w_packed, b_packed


def _choose_tile(batch):
    """Pick (tile_rows, padded_batch): tile as large as possible (<= TB_MAX),
    multiple of 16 rows, keeping >=2 grid steps (v7x megacore) and minimizing
    padded rows. Ties go to the larger tile."""
    cap = batch if batch < 2 * _ROW_GRAIN else batch // 2
    cap = max(_ROW_GRAIN, min(TB_MAX, (cap // _ROW_GRAIN) * _ROW_GRAIN))
    best_tb, best_pad = _ROW_GRAIN, pl.cdiv(batch, _ROW_GRAIN) * _ROW_GRAIN
    for cand in range(_ROW_GRAIN, cap + 1, _ROW_GRAIN):
        padded = pl.cdiv(batch, cand) * cand
        if padded < best_pad or (padded == best_pad and cand > best_tb):
            best_tb, best_pad = cand, padded
    return best_tb, best_pad


@jax.jit
def net_forward(x, w_packed, b_packed):
    """Exact module semantics: flatten EVERYTHING -> one vector -> (OUTPUT_N,).

    Launch-latency bound; kept in Pallas only so it can be fused into a larger
    pipeline. f32 elementwise (precision over the negligible perf delta)."""
    x_flat = jnp.reshape(x, (1, -1)).astype(jnp.float32)
    assert x_flat.shape[1] == INPUT_N
    x_pad = jnp.pad(x_flat, ((0, 7), (0, 0)))     # full f32 sublane tile (8 rows)
    vmem = pltpu.MemorySpace.VMEM
    kernel = functools.partial(mlp_kernel, elem_dtype=jnp.float32)
    out = pl.pallas_call(
        kernel,
        out_shape=jax.ShapeDtypeStruct((8, OUT_PAD), jnp.float32),
        in_specs=[pl.BlockSpec(memory_space=vmem)] * 3,
        out_specs=pl.BlockSpec(memory_space=vmem),
    )(x_pad, w_packed, b_packed)
    return out[0, :OUTPUT_N]


@functools.partial(jax.jit, static_argnames=("slice_output",))
def net_forward_batched(xb, w_packed, b_packed, *, slice_output=True):
    """Throughput path (vmap-of-module semantics): one flattened sample per row.

    Accepts f32 or bf16 inputs directly (no wrapper cast pass). With
    slice_output=False the raw (padded_batch, 128) bf16 slab is returned with
    zero extra HBM passes; with True the slice + f32 cast fuse into one pass
    over the half-size bf16 slab."""
    batch = xb.shape[0]
    x_flat = jnp.reshape(xb, (batch, -1))
    assert x_flat.shape[1] == INPUT_N
    tb, padded = _choose_tile(batch)
    if padded != batch:
        # Ragged batch: pad rows with zeros (extra copy, rare path).
        x_flat = jnp.pad(x_flat, ((0, padded - batch), (0, 0)))
    kernel = functools.partial(mlp_kernel, elem_dtype=_elementwise_dtype())
    out = pl.pallas_call(
        kernel,
        out_shape=jax.ShapeDtypeStruct((padded, OUT_PAD), _OUT_DTYPE),
        grid=(padded // tb,),
        in_specs=[
            pl.BlockSpec((tb, INPUT_N), lambda i: (i, 0)),
            # Resident weights/biases: constant index_map (DMA'd once) and a
            # single buffer — no wasted second VMEM copy.
            pl.BlockSpec((6, HIDDEN_N, OUT_PAD), lambda i: (0, 0, 0),
                         pipeline_mode=pl.Buffered(1)),
            pl.BlockSpec((8, OUT_PAD), lambda i: (0, 0),
                         pipeline_mode=pl.Buffered(1)),
        ],
        out_specs=pl.BlockSpec((tb, OUT_PAD), lambda i: (i, 0)),
        # TB<=1024 keeps total VMEM well under v5e's 16 MiB default scoped
        # limit, so no vmem_limit_bytes override is required.
        compiler_params=pltpu.CompilerParams(
            dimension_semantics=("parallel",)),       # v7x: shard grid over 2 TCs
    )(x_flat, w_packed, b_packed)
    if not slice_output:
        return out
    return out[:batch, :OUTPUT_N].astype(jnp.float32)


def init_params(key):
    """Deterministic init, PyTorch-style U(-1/sqrt(fan_in), 1/sqrt(fan_in)), (out,in) layout."""
    dims = [
        (INPUT_N, HIDDEN_N),    # input_layer
        (HIDDEN_N, HIDDEN_N),   # hidden_layer1
        (HIDDEN_N, HIDDEN_N),   # hidden_layer2
        (HIDDEN_N, HIDDEN_N),   # hidden_layer3
        (HIDDEN_N, HIDDEN_N),   # hidden_layer4
        (HIDDEN_N, OUTPUT_N),   # output_layer
    ]
    params = []
    for (fan_in, fan_out) in dims:
        key, kw, kb = jax.random.split(key, 3)
        bound = 1.0 / (fan_in ** 0.5)
        w = jax.random.uniform(kw, (fan_out, fan_in), jnp.float32, -bound, bound)
        b = jax.random.uniform(kb, (fan_out,), jnp.float32, -bound, bound)
        params.append((w, b))
    return params


def net_forward_ref(x, params):
    """Pure-JAX f32 reference mirroring the PyTorch forward exactly."""
    h = jnp.reshape(x, (-1,)).astype(jnp.float32)
    lin = lambda v, p: v @ jnp.transpose(p[0]) + p[1]
    h = _leaky_relu(lin(h, params[0]))
    skip = h
    h = _leaky_relu(lin(h, params[1]))
    h = _leaky_relu(lin(h, params[2]) + skip)
    skip = h
    h = _leaky_relu(lin(h, params[3]))
    h = _leaky_relu(lin(h, params[4]) + skip)
    return lin(h, params[5])


if __name__ == "__main__":
    key = jax.random.PRNGKey(0)
    key, kx, kb, kr = jax.random.split(key, 4)
    params = init_params(key)
    w_packed, b_packed = prepare_params(params)      # one-time, outside the hot path

    # --- single-sample path (exact module semantics) ---
    x = jax.random.normal(kx, INPUT_SHAPE, jnp.float32)
    y = net_forward(x, w_packed, b_packed)
    jax.block_until_ready(y)
    assert y.shape == (OUTPUT_N,)
    y_ref = net_forward_ref(x, params)
    assert jnp.allclose(y, y_ref, rtol=5e-2, atol=5e-2), float(jnp.max(jnp.abs(y - y_ref)))

    # --- batched throughput path: TB=1024, grid=2 (both v7x TCs get work) ---
    # bf16 weights + bf16 activations/output is a deliberate precision trade-off
    # (f32 matmul accumulation kept); compared at loose tolerance.
    B = 2048
    xb = jax.random.normal(kb, (B,) + INPUT_SHAPE, jnp.float32)
    yb = net_forward_batched(xb, w_packed, b_packed)
    jax.block_until_ready(yb)
    assert yb.shape == (B, OUTPUT_N)
    yb_ref = jax.vmap(lambda xi: net_forward_ref(xi, params))(xb)
    assert jnp.allclose(yb, yb_ref, rtol=5e-2, atol=5e-2), float(jnp.max(jnp.abs(yb - yb_ref)))

    # --- ragged batch (not a multiple of the tile): exercises cdiv + padding ---
    Br = 200
    xr = jax.random.normal(kr, (Br,) + INPUT_SHAPE, jnp.float32)
    yr = net_forward_batched(xr, w_packed, b_packed)
    jax.block_until_ready(yr)
    assert yr.shape == (Br, OUTPUT_N)
    yr_ref = jax.vmap(lambda xi: net_forward_ref(xi, params))(xr)
    assert jnp.allclose(yr, yr_ref, rtol=5e-2, atol=5e-2)

    print("KERNEL_OK")
</pallas_src>

<mosaic_0001>
module attributes {stable_mosaic.version = 11 : i64} {
  func.func @mlp_kernel(%arg0: memref<8x128xf32, #tpu.memory_space<vmem>>, %arg1: memref<6x128x128xbf16, #tpu.memory_space<vmem>>, %arg2: memref<8x128xf32, #tpu.memory_space<vmem>>, %arg3: memref<8x128xf32, #tpu.memory_space<vmem>>) attributes {dimension_semantics = [], scalar_prefetch = 0 : i64, scratch_operands = 0 : i64, tpu.core_type = #tpu.core_type<tc>} {
    %c0 = arith.constant 0 : index
    %c0_0 = arith.constant 0 : index
    %0 = vector.load %arg0[%c0, %c0_0] : memref<8x128xf32, #tpu.memory_space<vmem>>, vector<8x128xf32>
    %c0_1 = arith.constant 0 : index
    %c0_2 = arith.constant 0 : index
    %c0_3 = arith.constant 0 : index
    %1 = vector.load %arg1[%c0_1, %c0_2, %c0_3] : memref<6x128x128xbf16, #tpu.memory_space<vmem>>, vector<1x128x128xbf16>
    %2 = vector.shape_cast %1 : vector<1x128x128xbf16> to vector<128x128xbf16>
    %3 = arith.truncf %0 : vector<8x128xf32> to vector<8x128xbf16>
    %cst = arith.constant dense<0.000000e+00> : vector<8x128xf32>
    %4 = tpu.matmul %3, %2, %cst {dimension_numbers = #tpu.dot_dimension_numbers<[1], [0], [0], [1], [0, 0, 1, 1], [], []>} : vector<8x128xbf16>, vector<128x128xbf16>, vector<8x128xf32> -> vector<8x128xf32>
    %c0_4 = arith.constant 0 : index
    %c0_5 = arith.constant 0 : index
    %5 = vector.load %arg2[%c0_4, %c0_5] : memref<8x128xf32, #tpu.memory_space<vmem>>, vector<1x128xf32>
    %6 = vector.broadcast %5 : vector<1x128xf32> to vector<8x128xf32>
    %7 = arith.addf %4, %6 : vector<8x128xf32>
    %cst_6 = arith.constant 0.000000e+00 : f32
    %8 = vector.broadcast %cst_6 : f32 to vector<8x128xf32>
    %9 = arith.cmpf ogt, %7, %8 : vector<8x128xf32>
    %cst_7 = arith.constant 0.00999999977 : f32
    %10 = vector.broadcast %cst_7 : f32 to vector<8x128xf32>
    %11 = arith.mulf %10, %7 : vector<8x128xf32>
    %12 = arith.select %9, %7, %11 : vector<8x128xi1>, vector<8x128xf32>
    %c1 = arith.constant 1 : index
    %c0_8 = arith.constant 0 : index
    %c0_9 = arith.constant 0 : index
    %13 = vector.load %arg1[%c1, %c0_8, %c0_9] : memref<6x128x128xbf16, #tpu.memory_space<vmem>>, vector<1x128x128xbf16>
    %14 = vector.shape_cast %13 : vector<1x128x128xbf16> to vector<128x128xbf16>
    %15 = arith.truncf %12 : vector<8x128xf32> to vector<8x128xbf16>
    %cst_10 = arith.constant dense<0.000000e+00> : vector<8x128xf32>
    %16 = tpu.matmul %15, %14, %cst_10 {dimension_numbers = #tpu.dot_dimension_numbers<[1], [0], [0], [1], [0, 0, 1, 1], [], []>} : vector<8x128xbf16>, vector<128x128xbf16>, vector<8x128xf32> -> vector<8x128xf32>
    %c1_11 = arith.constant 1 : index
    %c0_12 = arith.constant 0 : index
    %17 = vector.load %arg2[%c1_11, %c0_12] : memref<8x128xf32, #tpu.memory_space<vmem>>, vector<1x128xf32>
    %18 = vector.broadcast %17 : vector<1x128xf32> to vector<8x128xf32>
    %19 = arith.addf %16, %18 : vector<8x128xf32>
    %cst_13 = arith.constant 0.000000e+00 : f32
    %20 = vector.broadcast %cst_13 : f32 to vector<8x128xf32>
    %21 = arith.cmpf ogt, %19, %20 : vector<8x128xf32>
    %cst_14 = arith.constant 0.00999999977 : f32
    %22 = vector.broadcast %cst_14 : f32 to vector<8x128xf32>
    %23 = arith.mulf %22, %19 : vector<8x128xf32>
    %24 = arith.select %21, %19, %23 : vector<8x128xi1>, vector<8x128xf32>
    %c2 = arith.constant 2 : index
    %c0_15 = arith.constant 0 : index
    %c0_16 = arith.constant 0 : index
    %25 = vector.load %arg1[%c2, %c0_15, %c0_16] : memref<6x128x128xbf16, #tpu.memory_space<vmem>>, vector<1x128x128xbf16>
    %26 = vector.shape_cast %25 : vector<1x128x128xbf16> to vector<128x128xbf16>
    %27 = arith.truncf %24 : vector<8x128xf32> to vector<8x128xbf16>
    %cst_17 = arith.constant dense<0.000000e+00> : vector<8x128xf32>
    %28 = tpu.matmul %27, %26, %cst_17 {dimension_numbers = #tpu.dot_dimension_numbers<[1], [0], [0], [1], [0, 0, 1, 1], [], []>} : vector<8x128xbf16>, vector<128x128xbf16>, vector<8x128xf32> -> vector<8x128xf32>
    %c2_18 = arith.constant 2 : index
    %c0_19 = arith.constant 0 : index
    %29 = vector.load %arg2[%c2_18, %c0_19] : memref<8x128xf32, #tpu.memory_space<vmem>>, vector<1x128xf32>
    %30 = vector.broadcast %29 : vector<1x128xf32> to vector<8x128xf32>
    %31 = arith.addf %28, %30 : vector<8x128xf32>
    %32 = arith.addf %31, %12 : vector<8x128xf32>
    %cst_20 = arith.constant 0.000000e+00 : f32
    %33 = vector.broadcast %cst_20 : f32 to vector<8x128xf32>
    %34 = arith.cmpf ogt, %32, %33 : vector<8x128xf32>
    %cst_21 = arith.constant 0.00999999977 : f32
    %35 = vector.broadcast %cst_21 : f32 to vector<8x128xf32>
    %36 = arith.mulf %35, %32 : vector<8x128xf32>
    %37 = arith.select %34, %32, %36 : vector<8x128xi1>, vector<8x128xf32>
    %c3 = arith.constant 3 : index
    %c0_22 = arith.constant 0 : index
    %c0_23 = arith.constant 0 : index
    %38 = vector.load %arg1[%c3, %c0_22, %c0_23] : memref<6x128x128xbf16, #tpu.memory_space<vmem>>, vector<1x128x128xbf16>
    %39 = vector.shape_cast %38 : vector<1x128x128xbf16> to vector<128x128xbf16>
    %40 = arith.truncf %37 : vector<8x128xf32> to vector<8x128xbf16>
    %cst_24 = arith.constant dense<0.000000e+00> : vector<8x128xf32>
    %41 = tpu.matmul %40, %39, %cst_24 {dimension_numbers = #tpu.dot_dimension_numbers<[1], [0], [0], [1], [0, 0, 1, 1], [], []>} : vector<8x128xbf16>, vector<128x128xbf16>, vector<8x128xf32> -> vector<8x128xf32>
    %c3_25 = arith.constant 3 : index
    %c0_26 = arith.constant 0 : index
    %42 = vector.load %arg2[%c3_25, %c0_26] : memref<8x128xf32, #tpu.memory_space<vmem>>, vector<1x128xf32>
    %43 = vector.broadcast %42 : vector<1x128xf32> to vector<8x128xf32>
    %44 = arith.addf %41, %43 : vector<8x128xf32>
    %cst_27 = arith.constant 0.000000e+00 : f32
    %45 = vector.broadcast %cst_27 : f32 to vector<8x128xf32>
    %46 = arith.cmpf ogt, %44, %45 : vector<8x128xf32>
    %cst_28 = arith.constant 0.00999999977 : f32
    %47 = vector.broadcast %cst_28 : f32 to vector<8x128xf32>
    %48 = arith.mulf %47, %44 : vector<8x128xf32>
    %49 = arith.select %46, %44, %48 : vector<8x128xi1>, vector<8x128xf32>
    %c4 = arith.constant 4 : index
    %c0_29 = arith.constant 0 : index
    %c0_30 = arith.constant 0 : index
    %50 = vector.load %arg1[%c4, %c0_29, %c0_30] : memref<6x128x128xbf16, #tpu.memory_space<vmem>>, vector<1x128x128xbf16>
    %51 = vector.shape_cast %50 : vector<1x128x128xbf16> to vector<128x128xbf16>
    %52 = arith.truncf %49 : vector<8x128xf32> to vector<8x128xbf16>
    %cst_31 = arith.constant dense<0.000000e+00> : vector<8x128xf32>
    %53 = tpu.matmul %52, %51, %cst_31 {dimension_numbers = #tpu.dot_dimension_numbers<[1], [0], [0], [1], [0, 0, 1, 1], [], []>} : vector<8x128xbf16>, vector<128x128xbf16>, vector<8x128xf32> -> vector<8x128xf32>
    %c4_32 = arith.constant 4 : index
    %c0_33 = arith.constant 0 : index
    %54 = vector.load %arg2[%c4_32, %c0_33] : memref<8x128xf32, #tpu.memory_space<vmem>>, vector<1x128xf32>
    %55 = vector.broadcast %54 : vector<1x128xf32> to vector<8x128xf32>
    %56 = arith.addf %53, %55 : vector<8x128xf32>
    %57 = arith.addf %56, %37 : vector<8x128xf32>
    %cst_34 = arith.constant 0.000000e+00 : f32
    %58 = vector.broadcast %cst_34 : f32 to vector<8x128xf32>
    %59 = arith.cmpf ogt, %57, %58 : vector<8x128xf32>
    %cst_35 = arith.constant 0.00999999977 : f32
    %60 = vector.broadcast %cst_35 : f32 to vector<8x128xf32>
    %61 = arith.mulf %60, %57 : vector<8x128xf32>
    %62 = arith.select %59, %57, %61 : vector<8x128xi1>, vector<8x128xf32>
    %c5 = arith.constant 5 : index
    %c0_36 = arith.constant 0 : index
    %c0_37 = arith.constant 0 : index
    %63 = vector.load %arg1[%c5, %c0_36, %c0_37] : memref<6x128x128xbf16, #tpu.memory_space<vmem>>, vector<1x128x128xbf16>
    %64 = vector.shape_cast %63 : vector<1x128x128xbf16> to vector<128x128xbf16>
    %65 = arith.truncf %62 : vector<8x128xf32> to vector<8x128xbf16>
    %cst_38 = arith.constant dense<0.000000e+00> : vector<8x128xf32>
    %66 = tpu.matmul %65, %64, %cst_38 {dimension_numbers = #tpu.dot_dimension_numbers<[1], [0], [0], [1], [0, 0, 1, 1], [], []>} : vector<8x128xbf16>, vector<128x128xbf16>, vector<8x128xf32> -> vector<8x128xf32>
    %c5_39 = arith.constant 5 : index
    %c0_40 = arith.constant 0 : index
    %67 = vector.load %arg2[%c5_39, %c0_40] : memref<8x128xf32, #tpu.memory_space<vmem>>, vector<1x128xf32>
    %68 = vector.broadcast %67 : vector<1x128xf32> to vector<8x128xf32>
    %69 = arith.addf %66, %68 : vector<8x128xf32>
    %c0_41 = arith.constant 0 : index
    %c0_42 = arith.constant 0 : index
    %70 = vector.load %arg3[%c0_41, %c0_42] : memref<8x128xf32, #tpu.memory_space<vmem>>, vector<8x128xf32>
    tpu.vector_store %arg3[%c0_41, %c0_42], %69 {strides = array<i32>} : memref<8x128xf32, #tpu.memory_space<vmem>>, vector<8x128xf32>,
    return
  }
}

</mosaic_0001>

<llo_original>
// kernel: net_forward.1
$region0: #{net_forward.1}
  #allocation0 [shape = 'u32[]', space=smem, size = 0x4, offset = 0x4, fixed_abs, tag = 'smem constant byte address 0x4 - core index']
  #allocation1 [shape = 'u32[144,128]{1,0:T(1,128)}', space=vmem, size = 0x12000, scoped, tag = 'internal scratch']
  %s0 = inlined_call_operand.vmem [shape: f32[8,128], index: 0, kind: input, shape index: {}]
  %s1 = inlined_call_operand.hbm [shape: bf16[6,128,128], index: 1, kind: input, shape index: {}]
  %s2 = inlined_call_operand.vmem [shape: f32[8,128], index: 2, kind: input, shape index: {}]
  %s3 = inlined_call_operand.vmem [shape: f32[8,128], index: 3, kind: output, shape index: {}]
  %s4 = sld [smem:[#allocation0]]
  $region26: #{net_forward.1} parent=0
    _
  %s6 = ssub.s32 1, %s4
  %s7 = scalar_select 0, %s6, %s4
  $region1: #{net_forward.1} parent=0
    #allocation2 [shape = 'u8[196608]{0}', space=vmem, size = 0x30000, scoped, tag = 'input window, operand 1, single buffered']
    #allocation3 [shape = 's32[1]{0}', space=sflag, size = 0x4, scoped, tag = 'scoped memory for net_forward.1']
    %8 = vsyncpa [#allocation3], 0
    // Predicated region
    $region2: #{net_forward.1} parent=1 // pred_check
      _
    $region3: #{net_forward.1} parent=1 // pred_check_branch
      %10 = sbr.rel (0) target = $region5
    $region4: #{net_forward.1} parent=1 // pred_region
      _
    $region5: #{net_forward.1} parent=1 // pred_fallthru
      _
    // Predicated region
    $region6: #{net_forward.1} parent=1 // pred_check
      _
    $region7: #{net_forward.1} parent=1 // pred_check_branch
      %12 = sbr.rel (0) target = $region9
    $region8: #{net_forward.1} parent=1 // pred_region
      %s14 = ssub.s32 6144, 6144
      %15 = vsyncadd [#allocation3], %s14
      %s16 = sshll.u32 [#allocation2], 4
      %s17 = int_to_ptr.vmem [resolvable:$true] %s16
      %22 = dma.hbm_to_vmem [thread:$0]  %s1, 6144, %s17, [#allocation3], 64, 64, 4
    $region9: #{net_forward.1} parent=1 // pred_fallthru
      _
    // Predicated region
    $region10: #{net_forward.1} parent=1 // pred_check
      _
    $region11: #{net_forward.1} parent=1 // pred_check_branch
      %24 = sbr.rel (0) target = $region13
    $region12: #{net_forward.1} parent=1 // pred_region
      _
    $region13: #{net_forward.1} parent=1 // pred_fallthru
      _
    // Predicated region
    $region14: #{net_forward.1} parent=1 // pred_check
      _
    $region15: #{net_forward.1} parent=1 // pred_check_branch
      %26 = sbr.rel (0) target = $region17
    $region16: #{net_forward.1} parent=1 // pred_region
      %27 = dma.done [#allocation3], 6144
    $region17: #{net_forward.1} parent=1 // pred_fallthru
      _
    %v29 = vld [vmem:[%s0] sm:$0xff]
    %v30 = vld [vmem:[#allocation2] sm:$0xf]
    %v31 = vld [vmem:[#allocation2 + $0x4] sm:$0xf]
    %v32 = vld [vmem:[#allocation2 + $0x8] sm:$0xf]
    %v33 = vld [vmem:[#allocation2 + $0xc] sm:$0xf]
    %v34 = vld [vmem:[#allocation2 + $0x10] sm:$0xf]
    %v35 = vld [vmem:[#allocation2 + $0x14] sm:$0xf]
    %v36 = vld [vmem:[#allocation2 + $0x18] sm:$0xf]
    %v37 = vld [vmem:[#allocation2 + $0x1c] sm:$0xf]
    %v38 = vld [vmem:[#allocation2 + $0x20] sm:$0xf]
    %v39 = vld [vmem:[#allocation2 + $0x24] sm:$0xf]
    %v40 = vld [vmem:[#allocation2 + $0x28] sm:$0xf]
    %v41 = vld [vmem:[#allocation2 + $0x2c] sm:$0xf]
    %v42 = vld [vmem:[#allocation2 + $0x30] sm:$0xf]
    %v43 = vld [vmem:[#allocation2 + $0x34] sm:$0xf]
    %v44 = vld [vmem:[#allocation2 + $0x38] sm:$0xf]
    %v45 = vld [vmem:[#allocation2 + $0x3c] sm:$0xf]
    %v46 = vpack.c.bf16 %v29, %v29
    %v47 = vld [vmem:[%s2] sm:$0x1]
    %v48 = vlaneseq
    %v49 = vshrl.u32 %v48, 7
    %v50 = vsub.s32 0, %v49
    %v51 = vrot.slane %v47, %v50
    %v68 = vunpack.c.l.b16 %v30
    %v69 = vunpack.c.l.b16 %v31
    %v70 = vunpack.c.l.b16 %v32
    %v71 = vunpack.c.l.b16 %v33
    %v72 = vunpack.c.l.b16 %v34
    %v73 = vunpack.c.l.b16 %v35
    %v74 = vunpack.c.l.b16 %v36
    %v75 = vunpack.c.l.b16 %v37
    %v76 = vunpack.c.l.b16 %v38
    %v77 = vunpack.c.l.b16 %v39
    %v78 = vunpack.c.l.b16 %v40
    %v79 = vunpack.c.l.b16 %v41
    %v80 = vunpack.c.l.b16 %v42
    %v81 = vunpack.c.l.b16 %v43
    %v82 = vunpack.c.l.b16 %v44
    %v83 = vunpack.c.l.b16 %v45
    %v84 = vpack.c.b16 %v69, %v68
    %v85 = vpack.c.b16 %v71, %v70
    %v86 = vpack.c.b16 %v73, %v72
    %v87 = vpack.c.b16 %v75, %v74
    %v88 = vpack.c.b16 %v77, %v76
    %v89 = vpack.c.b16 %v79, %v78
    %v90 = vpack.c.b16 %v81, %v80
    %v91 = vpack.c.b16 %v83, %v82
    %100 = vmatprep.subr.bf16.mxu0 0
    %101 = vmatpush1.bf16.msra.mxu0 %v84
    %102 = vmatprep.subr.bf16.mxu0 0
    %103 = vmatpush1.bf16.msra.mxu0 %v85
    %104 = vmatprep.subr.bf16.mxu0 0
    %105 = vmatpush1.bf16.msra.mxu0 %v86
    %106 = vmatprep.subr.bf16.mxu0 0
    %107 = vmatpush1.bf16.msra.mxu0 %v87
    %108 = vmatprep.subr.bf16.mxu0 0
    %109 = vmatpush1.bf16.msra.mxu0 %v88
    %110 = vmatprep.subr.bf16.mxu0 0
    %111 = vmatpush1.bf16.msra.mxu0 %v89
    %112 = vmatprep.subr.bf16.mxu0 0
    %113 = vmatpush1.bf16.msra.mxu0 %v90
    %114 = vmatprep.subr.bf16.mxu0 0
    %115 = vmatpush1.bf16.msra.mxu0 %v91
    %116 = vmatprep.subr.bf16.mxu0 0
    %117 = vmatpush1.bf16.msra.mxu0 0
    %118 = vmatprep.subr.bf16.mxu0 0
    %119 = vmatpush1.bf16.msra.mxu0 0
    %120 = vmatprep.subr.bf16.mxu0 0
    %121 = vmatpush1.bf16.msra.mxu0 0
    %122 = vmatprep.subr.bf16.mxu0 0
    %123 = vmatpush1.bf16.msra.mxu0 0
    %124 = vmatprep.subr.bf16.mxu0 0
    %125 = vmatpush1.bf16.msra.mxu0 0
    %126 = vmatprep.subr.bf16.mxu0 0
    %127 = vmatpush1.bf16.msra.mxu0 0
    %128 = vmatprep.subr.bf16.mxu0 0
    %129 = vmatpush1.bf16.msra.mxu0 0
    %130 = vmatprep.subr.bf16.mxu0 0
    %131 = vmatpush1.bf16.msra.mxu0 0
    %132 = vmatprep.mubr.bf16.mxu0 0
    %133 = vmatmul.mubr.bf16.gmra.mrb[0].mxu0 %v46
    %v134 = vpop.f32.mrb[0].mxu0
    %v135 = vadd.f32 %v51, %v134
    %v136 = vpop.f32.mrb[0].mxu0
    %v137 = vpop.f32.mrb[0].mxu0
    %v138 = vpop.f32.mrb[0].mxu0
    %139 = vdwg.mxu0
    %vm140 = vcmp.gt.f32.partialorder %v135, 0.0
    %v141 = vmul.f32 %v135, 0.01
    %v142 = vsel %vm140, %v135, %v141
    %s143 = scalar_lea.vmem [#allocation2], 64
    %v144 = vld [vmem:[%s143] sm:$0xf]
    %v145 = vld [vmem:[%s143 + $0x4] sm:$0xf]
    %v146 = vld [vmem:[%s143 + $0x8] sm:$0xf]
    %v147 = vld [vmem:[%s143 + $0xc] sm:$0xf]
    %v148 = vld [vmem:[%s143 + $0x10] sm:$0xf]
    %v149 = vld [vmem:[%s143 + $0x14] sm:$0xf]
    %v150 = vld [vmem:[%s143 + $0x18] sm:$0xf]
    %v151 = vld [vmem:[%s143 + $0x1c] sm:$0xf]
    %v152 = vld [vmem:[%s143 + $0x20] sm:$0xf]
    %v153 = vld [vmem:[%s143 + $0x24] sm:$0xf]
    %v154 = vld [vmem:[%s143 + $0x28] sm:$0xf]
    %v155 = vld [vmem:[%s143 + $0x2c] sm:$0xf]
    %v156 = vld [vmem:[%s143 + $0x30] sm:$0xf]
    %v157 = vld [vmem:[%s143 + $0x34] sm:$0xf]
    %v158 = vld [vmem:[%s143 + $0x38] sm:$0xf]
    %v159 = vld [vmem:[%s143 + $0x3c] sm:$0xf]
    %v160 = vpack.c.bf16 %v142, %v142
    %v161 = vld [vmem:[%s2 + $0x1] sm:$0x1]
    %v162 = vlaneseq
    %v163 = vshrl.u32 %v162, 7
    %v164 = vsub.s32 0, %v163
    %v165 = vrot.slane %v161, %v164
    %v182 = vunpack.c.l.b16 %v144
    %v183 = vunpack.c.l.b16 %v145
    %v184 = vunpack.c.l.b16 %v146
    %v185 = vunpack.c.l.b16 %v147
    %v186 = vunpack.c.l.b16 %v148
    %v187 = vunpack.c.l.b16 %v149
    %v188 = vunpack.c.l.b16 %v150
    %v189 = vunpack.c.l.b16 %v151
    %v190 = vunpack.c.l.b16 %v152
    %v191 = vunpack.c.l.b16 %v153
    %v192 = vunpack.c.l.b16 %v154
    %v193 = vunpack.c.l.b16 %v155
    %v194 = vunpack.c.l.b16 %v156
    %v195 = vunpack.c.l.b16 %v157
    %v196 = vunpack.c.l.b16 %v158
    %v197 = vunpack.c.l.b16 %v159
    %v198 = vpack.c.b16 %v183, %v182
    %v199 = vpack.c.b16 %v185, %v184
    %v200 = vpack.c.b16 %v187, %v186
    %v201 = vpack.c.b16 %v189, %v188
    %v202 = vpack.c.b16 %v191, %v190
    %v203 = vpack.c.b16 %v193, %v192
    %v204 = vpack.c.b16 %v195, %v194
    %v205 = vpack.c.b16 %v197, %v196
    %214 = vmatprep.subr.bf16.mxu0 0
    %215 = vmatpush1.bf16.msra.mxu0 %v198
    %216 = vmatprep.subr.bf16.mxu0 0
    %217 = vmatpush1.bf16.msra.mxu0 %v199
    %218 = vmatprep.subr.bf16.mxu0 0
    %219 = vmatpush1.bf16.msra.mxu0 %v200
    %220 = vmatprep.subr.bf16.mxu0 0
    %221 = vmatpush1.bf16.msra.mxu0 %v201
    %222 = vmatprep.subr.bf16.mxu0 0
    %223 = vmatpush1.bf16.msra.mxu0 %v202
    %224 = vmatprep.subr.bf16.mxu0 0
    %225 = vmatpush1.bf16.msra.mxu0 %v203
    %226 = vmatprep.subr.bf16.mxu0 0
    %227 = vmatpush1.bf16.msra.mxu0 %v204
    %228 = vmatprep.subr.bf16.mxu0 0
    %229 = vmatpush1.bf16.msra.mxu0 %v205
    %230 = vmatprep.subr.bf16.mxu0 0
    %231 = vmatpush1.bf16.msra.mxu0 0
    %232 = vmatprep.subr.bf16.mxu0 0
    %233 = vmatpush1.bf16.msra.mxu0 0
    %234 = vmatprep.subr.bf16.mxu0 0
    %235 = vmatpush1.bf16.msra.mxu0 0
    %236 = vmatprep.subr.bf16.mxu0 0
    %237 = vmatpush1.bf16.msra.mxu0 0
    %238 = vmatprep.subr.bf16.mxu0 0
    %239 = vmatpush1.bf16.msra.mxu0 0
    %240 = vmatprep.subr.bf16.mxu0 0
    %241 = vmatpush1.bf16.msra.mxu0 0
    %242 = vmatprep.subr.bf16.mxu0 0
    %243 = vmatpush1.bf16.msra.mxu0 0
    %244 = vmatprep.subr.bf16.mxu0 0
    %245 = vmatpush1.bf16.msra.mxu0 0
    %246 = vmatprep.mubr.bf16.mxu0 0
    %247 = vmatmul.mubr.bf16.gmra.mrb[0].mxu0 %v160
    %v248 = vpop.f32.mrb[0].mxu0
    %v249 = vadd.f32 %v165, %v248
    %v250 = vpop.f32.mrb[0].mxu0
    %v251 = vpop.f32.mrb[0].mxu0
    %v252 = vpop.f32.mrb[0].mxu0
    %253 = vdwg.mxu0
    %vm254 = vcmp.gt.f32.partialorder %v249, 0.0
    %v255 = vmul.f32 %v249, 0.01
    %v256 = vsel %vm254, %v249, %v255
    %s257 = scalar_lea.vmem [#allocation2], 128
    %v258 = vld [vmem:[%s257] sm:$0xf]
    %v259 = vld [vmem:[%s257 + $0x4] sm:$0xf]
    %v260 = vld [vmem:[%s257 + $0x8] sm:$0xf]
    %v261 = vld [vmem:[%s257 + $0xc] sm:$0xf]
    %v262 = vld [vmem:[%s257 + $0x10] sm:$0xf]
    %v263 = vld [vmem:[%s257 + $0x14] sm:$0xf]
    %v264 = vld [vmem:[%s257 + $0x18] sm:$0xf]
    %v265 = vld [vmem:[%s257 + $0x1c] sm:$0xf]
    %v266 = vld [vmem:[%s257 + $0x20] sm:$0xf]
    %v267 = vld [vmem:[%s257 + $0x24] sm:$0xf]
    %v268 = vld [vmem:[%s257 + $0x28] sm:$0xf]
    %v269 = vld [vmem:[%s257 + $0x2c] sm:$0xf]
    %v270 = vld [vmem:[%s257 + $0x30] sm:$0xf]
    %v271 = vld [vmem:[%s257 + $0x34] sm:$0xf]
    %v272 = vld [vmem:[%s257 + $0x38] sm:$0xf]
    %v273 = vld [vmem:[%s257 + $0x3c] sm:$0xf]
    %v274 = vpack.c.bf16 %v256, %v256
    %v275 = vld [vmem:[%s2 + $0x2] sm:$0x1]
    %v276 = vlaneseq
    %v277 = vshrl.u32 %v276, 7
    %v278 = vsub.s32 0, %v277
    %v279 = vrot.slane %v275, %v278
    %v296 = vunpack.c.l.b16 %v258
    %v297 = vunpack.c.l.b16 %v259
    %v298 = vunpack.c.l.b16 %v260
    %v299 = vunpack.c.l.b16 %v261
    %v300 = vunpack.c.l.b16 %v262
    %v301 = vunpack.c.l.b16 %v263
    %v302 = vunpack.c.l.b16 %v264
    %v303 = vunpack.c.l.b16 %v265
    %v304 = vunpack.c.l.b16 %v266
    %v305 = vunpack.c.l.b16 %v267
    %v306 = vunpack.c.l.b16 %v268
    %v307 = vunpack.c.l.b16 %v269
    %v308 = vunpack.c.l.b16 %v270
    %v309 = vunpack.c.l.b16 %v271
    %v310 = vunpack.c.l.b16 %v272
    %v311 = vunpack.c.l.b16 %v273
    %v312 = vpack.c.b16 %v297, %v296
    %v313 = vpack.c.b16 %v299, %v298
    %v314 = vpack.c.b16 %v301, %v300
    %v315 = vpack.c.b16 %v303, %v302
    %v316 = vpack.c.b16 %v305, %v304
    %v317 = vpack.c.b16 %v307, %v306
    %v318 = vpack.c.b16 %v309, %v308
    %v319 = vpack.c.b16 %v311, %v310
    %328 = vmatprep.subr.bf16.mxu0 0
    %329 = vmatpush1.bf16.msra.mxu0 %v312
    %330 = vmatprep.subr.bf16.mxu0 0
    %331 = vmatpush1.bf16.msra.mxu0 %v313
    %332 = vmatprep.subr.bf16.mxu0 0
    %333 = vmatpush1.bf16.msra.mxu0 %v314
    %334 = vmatprep.subr.bf16.mxu0 0
    %335 = vmatpush1.bf16.msra.mxu0 %v315
    %336 = vmatprep.subr.bf16.mxu0 0
    %337 = vmatpush1.bf16.msra.mxu0 %v316
    %338 = vmatprep.subr.bf16.mxu0 0
    %339 = vmatpush1.bf16.msra.mxu0 %v317
    %340 = vmatprep.subr.bf16.mxu0 0
    %341 = vmatpush1.bf16.msra.mxu0 %v318
    %342 = vmatprep.subr.bf16.mxu0 0
    %343 = vmatpush1.bf16.msra.mxu0 %v319
    %344 = vmatprep.subr.bf16.mxu0 0
    %345 = vmatpush1.bf16.msra.mxu0 0
    %346 = vmatprep.subr.bf16.mxu0 0
    %347 = vmatpush1.bf16.msra.mxu0 0
    %348 = vmatprep.subr.bf16.mxu0 0
    %349 = vmatpush1.bf16.msra.mxu0 0
    %350 = vmatprep.subr.bf16.mxu0 0
    %351 = vmatpush1.bf16.msra.mxu0 0
    %352 = vmatprep.subr.bf16.mxu0 0
    %353 = vmatpush1.bf16.msra.mxu0 0
    %354 = vmatprep.subr.bf16.mxu0 0
    %355 = vmatpush1.bf16.msra.mxu0 0
    %356 = vmatprep.subr.bf16.mxu0 0
    %357 = vmatpush1.bf16.msra.mxu0 0
    %358 = vmatprep.subr.bf16.mxu0 0
    %359 = vmatpush1.bf16.msra.mxu0 0
    %360 = vmatprep.mubr.bf16.mxu0 0
    %361 = vmatmul.mubr.bf16.gmra.mrb[0].mxu0 %v274
    %v362 = vpop.f32.mrb[0].mxu0
    %v363 = vadd.f32 %v279, %v362
    %v364 = vpop.f32.mrb[0].mxu0
    %v365 = vpop.f32.mrb[0].mxu0
    %v366 = vpop.f32.mrb[0].mxu0
    %367 = vdwg.mxu0
    %v368 = vadd.f32 %v363, %v142
    %vm369 = vcmp.gt.f32.partialorder %v368, 0.0
    %v370 = vmul.f32 %v368, 0.01
    %v371 = vsel %vm369, %v368, %v370
    %s372 = scalar_lea.vmem [#allocation2], 192
    %v373 = vld [vmem:[%s372] sm:$0xf]
    %v374 = vld [vmem:[%s372 + $0x4] sm:$0xf]
    %v375 = vld [vmem:[%s372 + $0x8] sm:$0xf]
    %v376 = vld [vmem:[%s372 + $0xc] sm:$0xf]
    %v377 = vld [vmem:[%s372 + $0x10] sm:$0xf]
    %v378 = vld [vmem:[%s372 + $0x14] sm:$0xf]
    %v379 = vld [vmem:[%s372 + $0x18] sm:$0xf]
    %v380 = vld [vmem:[%s372 + $0x1c] sm:$0xf]
    %v381 = vld [vmem:[%s372 + $0x20] sm:$0xf]
    %v382 = vld [vmem:[%s372 + $0x24] sm:$0xf]
    %v383 = vld [vmem:[%s372 + $0x28] sm:$0xf]
    %v384 = vld [vmem:[%s372 + $0x2c] sm:$0xf]
    %v385 = vld [vmem:[%s372 + $0x30] sm:$0xf]
    %v386 = vld [vmem:[%s372 + $0x34] sm:$0xf]
    %v387 = vld [vmem:[%s372 + $0x38] sm:$0xf]
    %v388 = vld [vmem:[%s372 + $0x3c] sm:$0xf]
    %v389 = vpack.c.bf16 %v371, %v371
    %v390 = vld [vmem:[%s2 + $0x3] sm:$0x1]
    %v391 = vlaneseq
    %v392 = vshrl.u32 %v391, 7
    %v393 = vsub.s32 0, %v392
    %v394 = vrot.slane %v390, %v393
    %v411 = vunpack.c.l.b16 %v373
    %v412 = vunpack.c.l.b16 %v374
    %v413 = vunpack.c.l.b16 %v375
    %v414 = vunpack.c.l.b16 %v376
    %v415 = vunpack.c.l.b16 %v377
    %v416 = vunpack.c.l.b16 %v378
    %v417 = vunpack.c.l.b16 %v379
    %v418 = vunpack.c.l.b16 %v380
    %v419 = vunpack.c.l.b16 %v381
    %v420 = vunpack.c.l.b16 %v382
    %v421 = vunpack.c.l.b16 %v383
    %v422 = vunpack.c.l.b16 %v384
    %v423 = vunpack.c.l.b16 %v385
    %v424 = vunpack.c.l.b16 %v386
    %v425 = vunpack.c.l.b16 %v387
    %v426 = vunpack.c.l.b16 %v388
    %v427 = vpack.c.b16 %v412, %v411
    %v428 = vpack.c.b16 %v414, %v413
    %v429 = vpack.c.b16 %v416, %v415
    %v430 = vpack.c.b16 %v418, %v417
    %v431 = vpack.c.b16 %v420, %v419
    %v432 = vpack.c.b16 %v422, %v421
    %v433 = vpack.c.b16 %v424, %v423
    %v434 = vpack.c.b16 %v426, %v425
    %443 = vmatprep.subr.bf16.mxu0 0
    %444 = vmatpush1.bf16.msra.mxu0 %v427
    %445 = vmatprep.subr.bf16.mxu0 0
    %446 = vmatpush1.bf16.msra.mxu0 %v428
    %447 = vmatprep.subr.bf16.mxu0 0
    %448 = vmatpush1.bf16.msra.mxu0 %v429
    %449 = vmatprep.subr.bf16.mxu0 0
    %450 = vmatpush1.bf16.msra.mxu0 %v430
    %451 = vmatprep.subr.bf16.mxu0 0
    %452 = vmatpush1.bf16.msra.mxu0 %v431
    %453 = vmatprep.subr.bf16.mxu0 0
    %454 = vmatpush1.bf16.msra.mxu0 %v432
    %455 = vmatprep.subr.bf16.mxu0 0
    %456 = vmatpush1.bf16.msra.mxu0 %v433
    %457 = vmatprep.subr.bf16.mxu0 0
    %458 = vmatpush1.bf16.msra.mxu0 %v434
    %459 = vmatprep.subr.bf16.mxu0 0
    %460 = vmatpush1.bf16.msra.mxu0 0
    %461 = vmatprep.subr.bf16.mxu0 0
    %462 = vmatpush1.bf16.msra.mxu0 0
    %463 = vmatprep.subr.bf16.mxu0 0
    %464 = vmatpush1.bf16.msra.mxu0 0
    %465 = vmatprep.subr.bf16.mxu0 0
    %466 = vmatpush1.bf16.msra.mxu0 0
    %467 = vmatprep.subr.bf16.mxu0 0
    %468 = vmatpush1.bf16.msra.mxu0 0
    %469 = vmatprep.subr.bf16.mxu0 0
    %470 = vmatpush1.bf16.msra.mxu0 0
    %471 = vmatprep.subr.bf16.mxu0 0
    %472 = vmatpush1.bf16.msra.mxu0 0
    %473 = vmatprep.subr.bf16.mxu0 0
    %474 = vmatpush1.bf16.msra.mxu0 0
    %475 = vmatprep.mubr.bf16.mxu0 0
    %476 = vmatmul.mubr.bf16.gmra.mrb[0].mxu0 %v389
    %v477 = vpop.f32.mrb[0].mxu0
    %v478 = vadd.f32 %v394, %v477
    %v479 = vpop.f32.mrb[0].mxu0
    %v480 = vpop.f32.mrb[0].mxu0
    %v481 = vpop.f32.mrb[0].mxu0
    %482 = vdwg.mxu0
    %vm483 = vcmp.gt.f32.partialorder %v478, 0.0
    %v484 = vmul.f32 %v478, 0.01
    %v485 = vsel %vm483, %v478, %v484
    %s486 = scalar_lea.vmem [#allocation2], 256
    %v487 = vld [vmem:[%s486] sm:$0xf]
    %v488 = vld [vmem:[%s486 + $0x4] sm:$0xf]
    %v489 = vld [vmem:[%s486 + $0x8] sm:$0xf]
    %v490 = vld [vmem:[%s486 + $0xc] sm:$0xf]
    %v491 = vld [vmem:[%s486 + $0x10] sm:$0xf]
    %v492 = vld [vmem:[%s486 + $0x14] sm:$0xf]
    %v493 = vld [vmem:[%s486 + $0x18] sm:$0xf]
    %v494 = vld [vmem:[%s486 + $0x1c] sm:$0xf]
    %v495 = vld [vmem:[%s486 + $0x20] sm:$0xf]
    %v496 = vld [vmem:[%s486 + $0x24] sm:$0xf]
    %v497 = vld [vmem:[%s486 + $0x28] sm:$0xf]
    %v498 = vld [vmem:[%s486 + $0x2c] sm:$0xf]
    %v499 = vld [vmem:[%s486 + $0x30] sm:$0xf]
    %v500 = vld [vmem:[%s486 + $0x34] sm:$0xf]
    %v501 = vld [vmem:[%s486 + $0x38] sm:$0xf]
    %v502 = vld [vmem:[%s486 + $0x3c] sm:$0xf]
    %v503 = vpack.c.bf16 %v485, %v485
    %v504 = vld [vmem:[%s2 + $0x4] sm:$0x1]
    %v505 = vlaneseq
    %v506 = vshrl.u32 %v505, 7
    %v507 = vsub.s32 0, %v506
    %v508 = vrot.slane %v504, %v507
    %v525 = vunpack.c.l.b16 %v487
    %v526 = vunpack.c.l.b16 %v488
    %v527 = vunpack.c.l.b16 %v489
    %v528 = vunpack.c.l.b16 %v490
    %v529 = vunpack.c.l.b16 %v491
    %v530 = vunpack.c.l.b16 %v492
    %v531 = vunpack.c.l.b16 %v493
    %v532 = vunpack.c.l.b16 %v494
    %v533 = vunpack.c.l.b16 %v495
    %v534 = vunpack.c.l.b16 %v496
    %v535 = vunpack.c.l.b16 %v497
    %v536 = vunpack.c.l.b16 %v498
    %v537 = vunpack.c.l.b16 %v499
    %v538 = vunpack.c.l.b16 %v500
    %v539 = vunpack.c.l.b16 %v501
    %v540 = vunpack.c.l.b16 %v502
    %v541 = vpack.c.b16 %v526, %v525
    %v542 = vpack.c.b16 %v528, %v527
    %v543 = vpack.c.b16 %v530, %v529
    %v544 = vpack.c.b16 %v532, %v531
    %v545 = vpack.c.b16 %v534, %v533
    %v546 = vpack.c.b16 %v536, %v535
    %v547 = vpack.c.b16 %v538, %v537
    %v548 = vpack.c.b16 %v540, %v539
    %557 = vmatprep.subr.bf16.mxu0 0
    %558 = vmatpush1.bf16.msra.mxu0 %v541
    %559 = vmatprep.subr.bf16.mxu0 0
    %560 = vmatpush1.bf16.msra.mxu0 %v542
    %561 = vmatprep.subr.bf16.mxu0 0
    %562 = vmatpush1.bf16.msra.mxu0 %v543
    %563 = vmatprep.subr.bf16.mxu0 0
    %564 = vmatpush1.bf16.msra.mxu0 %v544
    %565 = vmatprep.subr.bf16.mxu0 0
    %566 = vmatpush1.bf16.msra.mxu0 %v545
    %567 = vmatprep.subr.bf16.mxu0 0
    %568 = vmatpush1.bf16.msra.mxu0 %v546
    %569 = vmatprep.subr.bf16.mxu0 0
    %570 = vmatpush1.bf16.msra.mxu0 %v547
    %571 = vmatprep.subr.bf16.mxu0 0
    %572 = vmatpush1.bf16.msra.mxu0 %v548
    %573 = vmatprep.subr.bf16.mxu0 0
    %574 = vmatpush1.bf16.msra.mxu0 0
    %575 = vmatprep.subr.bf16.mxu0 0
    %576 = vmatpush1.bf16.msra.mxu0 0
    %577 = vmatprep.subr.bf16.mxu0 0
    %578 = vmatpush1.bf16.msra.mxu0 0
    %579 = vmatprep.subr.bf16.mxu0 0
    %580 = vmatpush1.bf16.msra.mxu0 0
    %581 = vmatprep.subr.bf16.mxu0 0
    %582 = vmatpush1.bf16.msra.mxu0 0
    %583 = vmatprep.subr.bf16.mxu0 0
    %584 = vmatpush1.bf16.msra.mxu0 0
    %585 = vmatprep.subr.bf16.mxu0 0
    %586 = vmatpush1.bf16.msra.mxu0 0
    %587 = vmatprep.subr.bf16.mxu0 0
    %588 = vmatpush1.bf16.msra.mxu0 0
    %589 = vmatprep.mubr.bf16.mxu0 0
    %590 = vmatmul.mubr.bf16.gmra.mrb[0].mxu0 %v503
    %v591 = vpop.f32.mrb[0].mxu0
    %v592 = vadd.f32 %v508, %v591
    %v593 = vpop.f32.mrb[0].mxu0
    %v594 = vpop.f32.mrb[0].mxu0
    %v595 = vpop.f32.mrb[0].mxu0
    %596 = vdwg.mxu0
    %v597 = vadd.f32 %v592, %v371
    %vm598 = vcmp.gt.f32.partialorder %v597, 0.0
    %v599 = vmul.f32 %v597, 0.01
    %v600 = vsel %vm598, %v597, %v599
    %s601 = scalar_lea.vmem [#allocation2], 320
    %v602 = vld [vmem:[%s601] sm:$0xf]
    %v603 = vld [vmem:[%s601 + $0x4] sm:$0xf]
    %v604 = vld [vmem:[%s601 + $0x8] sm:$0xf]
    %v605 = vld [vmem:[%s601 + $0xc] sm:$0xf]
    %v606 = vld [vmem:[%s601 + $0x10] sm:$0xf]
    %v607 = vld [vmem:[%s601 + $0x14] sm:$0xf]
    %v608 = vld [vmem:[%s601 + $0x18] sm:$0xf]
    %v609 = vld [vmem:[%s601 + $0x1c] sm:$0xf]
    %v610 = vld [vmem:[%s601 + $0x20] sm:$0xf]
    %v611 = vld [vmem:[%s601 + $0x24] sm:$0xf]
    %v612 = vld [vmem:[%s601 + $0x28] sm:$0xf]
    %v613 = vld [vmem:[%s601 + $0x2c] sm:$0xf]
    %v614 = vld [vmem:[%s601 + $0x30] sm:$0xf]
    %v615 = vld [vmem:[%s601 + $0x34] sm:$0xf]
    %v616 = vld [vmem:[%s601 + $0x38] sm:$0xf]
    %v617 = vld [vmem:[%s601 + $0x3c] sm:$0xf]
    %v618 = vpack.c.bf16 %v600, %v600
    %v619 = vld [vmem:[%s2 + $0x5] sm:$0x1]
    %v620 = vlaneseq
    %v621 = vshrl.u32 %v620, 7
    %v622 = vsub.s32 0, %v621
    %v623 = vrot.slane %v619, %v622
    %v640 = vunpack.c.l.b16 %v602
    %v641 = vunpack.c.l.b16 %v603
    %v642 = vunpack.c.l.b16 %v604
    %v643 = vunpack.c.l.b16 %v605
    %v644 = vunpack.c.l.b16 %v606
    %v645 = vunpack.c.l.b16 %v607
    %v646 = vunpack.c.l.b16 %v608
    %v647 = vunpack.c.l.b16 %v609
    %v648 = vunpack.c.l.b16 %v610
    %v649 = vunpack.c.l.b16 %v611
    %v650 = vunpack.c.l.b16 %v612
    %v651 = vunpack.c.l.b16 %v613
    %v652 = vunpack.c.l.b16 %v614
    %v653 = vunpack.c.l.b16 %v615
    %v654 = vunpack.c.l.b16 %v616
    %v655 = vunpack.c.l.b16 %v617
    %v656 = vpack.c.b16 %v641, %v640
    %v657 = vpack.c.b16 %v643, %v642
    %v658 = vpack.c.b16 %v645, %v644
    %v659 = vpack.c.b16 %v647, %v646
    %v660 = vpack.c.b16 %v649, %v648
    %v661 = vpack.c.b16 %v651, %v650
    %v662 = vpack.c.b16 %v653, %v652
    %v663 = vpack.c.b16 %v655, %v654
    %672 = vmatprep.subr.bf16.mxu0 0
    %673 = vmatpush1.bf16.msra.mxu0 %v656
    %674 = vmatprep.subr.bf16.mxu0 0
    %675 = vmatpush1.bf16.msra.mxu0 %v657
    %676 = vmatprep.subr.bf16.mxu0 0
    %677 = vmatpush1.bf16.msra.mxu0 %v658
    %678 = vmatprep.subr.bf16.mxu0 0
    %679 = vmatpush1.bf16.msra.mxu0 %v659
    %680 = vmatprep.subr.bf16.mxu0 0
    %681 = vmatpush1.bf16.msra.mxu0 %v660
    %682 = vmatprep.subr.bf16.mxu0 0
    %683 = vmatpush1.bf16.msra.mxu0 %v661
    %684 = vmatprep.subr.bf16.mxu0 0
    %685 = vmatpush1.bf16.msra.mxu0 %v662
    %686 = vmatprep.subr.bf16.mxu0 0
    %687 = vmatpush1.bf16.msra.mxu0 %v663
    %688 = vmatprep.subr.bf16.mxu0 0
    %689 = vmatpush1.bf16.msra.mxu0 0
    %690 = vmatprep.subr.bf16.mxu0 0
    %691 = vmatpush1.bf16.msra.mxu0 0
    %692 = vmatprep.subr.bf16.mxu0 0
    %693 = vmatpush1.bf16.msra.mxu0 0
    %694 = vmatprep.subr.bf16.mxu0 0
    %695 = vmatpush1.bf16.msra.mxu0 0
    %696 = vmatprep.subr.bf16.mxu0 0
    %697 = vmatpush1.bf16.msra.mxu0 0
    %698 = vmatprep.subr.bf16.mxu0 0
    %699 = vmatpush1.bf16.msra.mxu0 0
    %700 = vmatprep.subr.bf16.mxu0 0
    %701 = vmatpush1.bf16.msra.mxu0 0
    %702 = vmatprep.subr.bf16.mxu0 0
    %703 = vmatpush1.bf16.msra.mxu0 0
    %704 = vmatprep.mubr.bf16.mxu0 0
    %705 = vmatmul.mubr.bf16.gmra.mrb[0].mxu0 %v618
    %v706 = vpop.f32.mrb[0].mxu0
    %v707 = vadd.f32 %v623, %v706
    %v708 = vpop.f32.mrb[0].mxu0
    %v709 = vpop.f32.mrb[0].mxu0
    %v710 = vpop.f32.mrb[0].mxu0
    %711 = vdwg.mxu0
    %712 = vst [vmem:[%s3] sm:$0xff] %v707
    // Predicated region
    $region18: #{net_forward.1} parent=1 // pred_check
      _
    $region19: #{net_forward.1} parent=1 // pred_check_branch
      %714 = sbr.rel (0) target = $region21
    $region20: #{net_forward.1} parent=1 // pred_region
      _
    $region21: #{net_forward.1} parent=1 // pred_fallthru
      _
    // Predicated region
    $region22: #{net_forward.1} parent=1 // pred_check
      _
    $region23: #{net_forward.1} parent=1 // pred_check_branch
      %716 = sbr.rel (0) target = $region25
    $region24: #{net_forward.1} parent=1 // pred_region
      _
    $region25: #{net_forward.1} parent=1 // pred_fallthru
      _
    %717 = vsyncpa [#allocation3], 1

</llo_original>
